<compile_context>
chip_gen: v5e
topology: v5e:2x2
jax: 0.10.0
libtpu: 0.0.40
codegen_flags: <defaults>
</compile_context>

<pallas_src>
import functools

import jax
import jax.numpy as jnp
from jax.experimental import pallas as pl
from jax.experimental.pallas import tpu as pltpu

OUT_LANES = 128  # lane-dense packed output width


def _round_up(x: int, m: int) -> int:
    return (x + m - 1) // m * m


def policy_kernel(obs_ref, gum_ref, w1_ref, b1_ref, w2_ref, b2_ref, out_ref):
    # ---- MLP hot path (MXU, bf16 inputs, f32 accumulation) ----
    obs = obs_ref[...].astype(jnp.bfloat16)
    h = jnp.dot(obs, w1_ref[...], preferred_element_type=jnp.float32) + b1_ref[...]
    h = jnp.maximum(h, 0.0)
    logits = (
        jnp.dot(h.astype(jnp.bfloat16), w2_ref[...], preferred_element_type=jnp.float32)
        + b2_ref[...]
    )  # (TB, A_PAD); padded action columns are -inf via b2

    # ---- categorical sample via Gumbel-max ----
    # argmax is invariant to the per-row log-softmax constants, so sample from raw
    # logits + gumbel; this decouples the sampling path from the lse path.
    scores = logits + gum_ref[...]
    col = jax.lax.broadcasted_iota(jnp.int32, scores.shape, 1)
    max_s = jnp.max(scores, axis=-1, keepdims=True)
    sentinel = jnp.int32(scores.shape[-1])
    cand = jnp.where(scores >= max_s, col, sentinel)
    action = jnp.min(cand, axis=-1, keepdims=True)  # (TB, 1) int32, first-max wins

    # ---- numerically stable log-softmax (== torch Categorical(logits=...)) ----
    m = jnp.max(logits, axis=-1, keepdims=True)
    z = logits - m
    lse = jnp.log(jnp.sum(jnp.exp(z), axis=-1, keepdims=True))
    log_probs = z - lse  # (TB, A_PAD); padded columns are -inf

    # log_prob of the sampled action via where + max (avoids -inf * 0 -> NaN)
    logp = jnp.max(
        jnp.where(col == action, log_probs, -jnp.inf), axis=-1, keepdims=True
    )  # (TB, 1)

    # ---- lane-dense packed output: lane 0 = action (as f32), lane 1 = log_prob ----
    out_col = jax.lax.broadcasted_iota(
        jnp.int32, (out_ref.shape[0], out_ref.shape[1]), 1
    )
    action_f = action.astype(jnp.float32)
    out_ref[...] = jnp.where(out_col == 0, action_f, jnp.where(out_col == 1, logp, 0.0))


def init_params(key, obs_dim: int, n_hidden: int, n_acts: int):
    """PyTorch-style fan-in uniform init, stored padded to 128-lane tiles."""
    h_pad = _round_up(max(n_hidden, 1), 128)
    a_pad = _round_up(max(n_acts, 1), 128)
    k1, k2, k3, k4 = jax.random.split(key, 4)
    bound1 = 1.0 / jnp.sqrt(obs_dim)
    bound2 = 1.0 / jnp.sqrt(n_hidden)
    w1 = jax.random.uniform(k1, (obs_dim, n_hidden), jnp.float32, -bound1, bound1)
    b1 = jax.random.uniform(k2, (1, n_hidden), jnp.float32, -bound1, bound1)
    w2 = jax.random.uniform(k3, (n_hidden, n_acts), jnp.float32, -bound2, bound2)
    b2 = jax.random.uniform(k4, (1, n_acts), jnp.float32, -bound2, bound2)
    # Pad: extra hidden columns/rows are zero; extra action biases are -inf so the
    # softmax / argmax never see the padded action lanes.
    w1p = jnp.zeros((obs_dim, h_pad), jnp.float32).at[:, :n_hidden].set(w1)
    b1p = jnp.zeros((1, h_pad), jnp.float32).at[:, :n_hidden].set(b1)
    w2p = jnp.zeros((h_pad, a_pad), jnp.float32).at[:n_hidden, :n_acts].set(w2)
    b2p = jnp.full((1, a_pad), -jnp.inf, jnp.float32).at[:, :n_acts].set(b2)
    return {
        "w1": w1p.astype(jnp.bfloat16),
        "b1": b1p,
        "w2": w2p.astype(jnp.bfloat16),
        "b2": b2p,
        "n_acts": n_acts,
    }


@functools.partial(jax.jit, static_argnames=())
def discrete_policy_forward(obs, params, key):
    """Returns (action[int32, (B,)], log_prob[float32, (B,)])."""
    B, obs_dim = obs.shape
    h_pad = params["w1"].shape[1]
    a_pad = params["w2"].shape[1]

    # Batch tile: one grid step at small B; 512-row tiles when streaming big batches.
    tb = 512 if B >= 512 else _round_up(B, 8)
    b_pad = _round_up(B, tb)
    if b_pad != B:
        obs = jnp.zeros((b_pad, obs_dim), obs.dtype).at[:B].set(obs)

    # Gumbel noise for Gumbel-max categorical sampling (host-side PRNG; the on-chip
    # stateful PRNG primitive is TPU-only and breaks interpret/CPU lowering).
    gumbel = jax.random.gumbel(key, (b_pad, a_pad), dtype=jnp.float32)

    packed = pl.pallas_call(
        policy_kernel,
        out_shape=jax.ShapeDtypeStruct((b_pad, OUT_LANES), jnp.float32),
        grid_spec=pltpu.PrefetchScalarGridSpec(
            num_scalar_prefetch=0,
            grid=(b_pad // tb,),
            in_specs=[
                pl.BlockSpec((tb, obs_dim), lambda i: (i, 0)),   # obs tile streams
                pl.BlockSpec((tb, a_pad), lambda i: (i, 0)),     # gumbel tile streams
                pl.BlockSpec((obs_dim, h_pad), lambda i: (0, 0)),  # weights stay resident
                pl.BlockSpec((1, h_pad), lambda i: (0, 0)),
                pl.BlockSpec((h_pad, a_pad), lambda i: (0, 0)),
                pl.BlockSpec((1, a_pad), lambda i: (0, 0)),
            ],
            out_specs=pl.BlockSpec((tb, OUT_LANES), lambda i: (i, 0)),
        ),
        compiler_params=pltpu.CompilerParams(dimension_semantics=("parallel",)),
    )(obs, gumbel, params["w1"], params["b1"], params["w2"], params["b2"])

    action = packed[:B, 0].astype(jnp.int32)
    log_prob = packed[:B, 1]
    return action, log_prob


if __name__ == "__main__":
    obs_dim, n_hidden, n_acts = 16, 32, 8
    batch = 8

    key = jax.random.PRNGKey(0)
    pkey, okey, skey = jax.random.split(key, 3)
    params = init_params(pkey, obs_dim, n_hidden, n_acts)
    obs = jax.random.normal(okey, (batch, obs_dim), dtype=jnp.float32)

    action, log_prob = discrete_policy_forward(obs, params, skey)
    jax.block_until_ready((action, log_prob))

    # sanity checks on semantics
    assert action.shape == (batch,) and action.dtype == jnp.int32
    assert log_prob.shape == (batch,) and log_prob.dtype == jnp.float32
    assert bool(jnp.all(action >= 0)) and bool(jnp.all(action < n_acts))
    assert bool(jnp.all(jnp.isfinite(log_prob))) and bool(jnp.all(log_prob <= 0.0))

    print("KERNEL_OK")
</pallas_src>

<mosaic_0001>
module attributes {stable_mosaic.version = 11 : i64} {
  func.func @policy_kernel(%arg0: i32, %arg1: memref<8x16xf32, #tpu.memory_space<vmem>>, %arg2: memref<8x128xf32, #tpu.memory_space<vmem>>, %arg3: memref<16x128xbf16, #tpu.memory_space<vmem>>, %arg4: memref<1x128xf32, #tpu.memory_space<vmem>>, %arg5: memref<128x128xbf16, #tpu.memory_space<vmem>>, %arg6: memref<1x128xf32, #tpu.memory_space<vmem>>, %arg7: memref<8x128xf32, #tpu.memory_space<vmem>>) attributes {dimension_semantics = [#tpu.dimension_semantics<parallel>], iteration_bounds = array<i64: 1>, scalar_prefetch = 0 : i64, scratch_operands = 0 : i64, tpu.core_type = #tpu.core_type<tc>, window_params = [{transform_indices = @transform_0, window_bounds = array<i64: 8, 16>}, {transform_indices = @transform_1, window_bounds = array<i64: 8, 128>}, {pipeline_mode = #tpu.pipeline_mode<synchronous>, transform_indices = @transform_2, window_bounds = array<i64: 16, 128>}, {pipeline_mode = #tpu.pipeline_mode<synchronous>, transform_indices = @transform_3, window_bounds = array<i64: 1, 128>}, {pipeline_mode = #tpu.pipeline_mode<synchronous>, transform_indices = @transform_4, window_bounds = array<i64: 128, 128>}, {pipeline_mode = #tpu.pipeline_mode<synchronous>, transform_indices = @transform_5, window_bounds = array<i64: 1, 128>}, {transform_indices = @transform_6, window_bounds = array<i64: 8, 128>}]} {
    %c0 = arith.constant 0 : index
    %c0_0 = arith.constant 0 : index
    %0 = vector.load %arg1[%c0, %c0_0] : memref<8x16xf32, #tpu.memory_space<vmem>>, vector<8x16xf32>
    %1 = arith.truncf %0 : vector<8x16xf32> to vector<8x16xbf16>
    %c0_1 = arith.constant 0 : index
    %c0_2 = arith.constant 0 : index
    %2 = vector.load %arg3[%c0_1, %c0_2] : memref<16x128xbf16, #tpu.memory_space<vmem>>, vector<16x128xbf16>
    %cst = arith.constant dense<0.000000e+00> : vector<8x128xf32>
    %3 = tpu.matmul %1, %2, %cst {dimension_numbers = #tpu.dot_dimension_numbers<[1], [0], [0], [1], [0, 0, 1, 1], [], []>} : vector<8x16xbf16>, vector<16x128xbf16>, vector<8x128xf32> -> vector<8x128xf32>
    %c0_3 = arith.constant 0 : index
    %c0_4 = arith.constant 0 : index
    %4 = vector.load %arg4[%c0_3, %c0_4] : memref<1x128xf32, #tpu.memory_space<vmem>>, vector<1x128xf32>
    %5 = vector.broadcast %4 : vector<1x128xf32> to vector<8x128xf32>
    %6 = arith.addf %3, %5 : vector<8x128xf32>
    %cst_5 = arith.constant 0.000000e+00 : f32
    %7 = vector.broadcast %cst_5 : f32 to vector<8x128xf32>
    %8 = arith.maximumf %6, %7 : vector<8x128xf32>
    %9 = arith.truncf %8 : vector<8x128xf32> to vector<8x128xbf16>
    %c0_6 = arith.constant 0 : index
    %c0_7 = arith.constant 0 : index
    %10 = vector.load %arg5[%c0_6, %c0_7] : memref<128x128xbf16, #tpu.memory_space<vmem>>, vector<128x128xbf16>
    %cst_8 = arith.constant dense<0.000000e+00> : vector<8x128xf32>
    %11 = tpu.matmul %9, %10, %cst_8 {dimension_numbers = #tpu.dot_dimension_numbers<[1], [0], [0], [1], [0, 0, 1, 1], [], []>} : vector<8x128xbf16>, vector<128x128xbf16>, vector<8x128xf32> -> vector<8x128xf32>
    %c0_9 = arith.constant 0 : index
    %c0_10 = arith.constant 0 : index
    %12 = vector.load %arg6[%c0_9, %c0_10] : memref<1x128xf32, #tpu.memory_space<vmem>>, vector<1x128xf32>
    %13 = vector.broadcast %12 : vector<1x128xf32> to vector<8x128xf32>
    %14 = arith.addf %11, %13 : vector<8x128xf32>
    %c0_11 = arith.constant 0 : index
    %c0_12 = arith.constant 0 : index
    %15 = vector.load %arg2[%c0_11, %c0_12] : memref<8x128xf32, #tpu.memory_space<vmem>>, vector<8x128xf32>
    %16 = arith.addf %14, %15 : vector<8x128xf32>
    %17 = tpu.iota {dimensions = array<i32: 1>} : vector<8x128xi32>
    %cst_13 = arith.constant dense<0xFF800000> : vector<8xf32>
    %18 = vector.multi_reduction <maximumf>, %16, %cst_13 [1] : vector<8x128xf32> to vector<8xf32>
    %19 = vector.shape_cast %18 : vector<8xf32> to vector<8x1xf32>
    %20 = vector.broadcast %19 : vector<8x1xf32> to vector<8x128xf32>
    %21 = arith.cmpf oge, %16, %20 : vector<8x128xf32>
    %c128_i32 = arith.constant 128 : i32
    %22 = vector.broadcast %c128_i32 : i32 to vector<8x128xi32>
    %23 = arith.select %21, %17, %22 : vector<8x128xi1>, vector<8x128xi32>
    %cst_14 = arith.constant dense<2147483647> : vector<8xi32>
    %24 = vector.multi_reduction <minsi>, %23, %cst_14 [1] : vector<8x128xi32> to vector<8xi32>
    %25 = vector.shape_cast %24 : vector<8xi32> to vector<8x1xi32>
    %cst_15 = arith.constant dense<0xFF800000> : vector<8xf32>
    %26 = vector.multi_reduction <maximumf>, %14, %cst_15 [1] : vector<8x128xf32> to vector<8xf32>
    %27 = vector.shape_cast %26 : vector<8xf32> to vector<8x1xf32>
    %28 = vector.broadcast %27 : vector<8x1xf32> to vector<8x128xf32>
    %29 = arith.subf %14, %28 : vector<8x128xf32>
    %30 = math.exp %29 : vector<8x128xf32>
    %cst_16 = arith.constant dense<0.000000e+00> : vector<8xf32>
    %31 = vector.multi_reduction <add>, %30, %cst_16 [1] : vector<8x128xf32> to vector<8xf32>
    %32 = vector.shape_cast %31 : vector<8xf32> to vector<8x1xf32>
    %33 = math.log %32 : vector<8x1xf32>
    %34 = vector.broadcast %33 : vector<8x1xf32> to vector<8x128xf32>
    %35 = arith.subf %29, %34 : vector<8x128xf32>
    %36 = vector.broadcast %25 : vector<8x1xi32> to vector<8x128xi32>
    %37 = arith.cmpi eq, %17, %36 : vector<8x128xi32>
    %cst_17 = arith.constant 0xFF800000 : f32
    %38 = vector.broadcast %cst_17 : f32 to vector<8x128xf32>
    %39 = arith.select %37, %35, %38 : vector<8x128xi1>, vector<8x128xf32>
    %cst_18 = arith.constant dense<0xFF800000> : vector<8xf32>
    %40 = vector.multi_reduction <maximumf>, %39, %cst_18 [1] : vector<8x128xf32> to vector<8xf32>
    %41 = vector.shape_cast %40 : vector<8xf32> to vector<8x1xf32>
    %42 = tpu.iota {dimensions = array<i32: 1>} : vector<8x128xi32>
    %43 = arith.sitofp %25 : vector<8x1xi32> to vector<8x1xf32>
    %c0_i32 = arith.constant 0 : i32
    %44 = vector.broadcast %c0_i32 : i32 to vector<8x128xi32>
    %45 = arith.cmpi eq, %42, %44 : vector<8x128xi32>
    %c1_i32 = arith.constant 1 : i32
    %46 = vector.broadcast %c1_i32 : i32 to vector<8x128xi32>
    %47 = arith.cmpi eq, %42, %46 : vector<8x128xi32>
    %cst_19 = arith.constant 0.000000e+00 : f32
    %48 = vector.shape_cast %41 : vector<8x1xf32> to vector<8x1xf32>
    %49 = vector.broadcast %48 : vector<8x1xf32> to vector<8x128xf32>
    %50 = vector.broadcast %cst_19 : f32 to vector<8x128xf32>
    %51 = arith.select %47, %49, %50 : vector<8x128xi1>, vector<8x128xf32>
    %52 = vector.shape_cast %43 : vector<8x1xf32> to vector<8x1xf32>
    %53 = vector.broadcast %52 : vector<8x1xf32> to vector<8x128xf32>
    %54 = arith.select %45, %53, %51 : vector<8x128xi1>, vector<8x128xf32>
    %c0_20 = arith.constant 0 : index
    %c0_21 = arith.constant 0 : index
    %55 = vector.load %arg7[%c0_20, %c0_21] : memref<8x128xf32, #tpu.memory_space<vmem>>, vector<8x128xf32>
    tpu.vector_store %arg7[%c0_20, %c0_21], %54 {strides = array<i32>} : memref<8x128xf32, #tpu.memory_space<vmem>>, vector<8x128xf32>,
    return
  }
  func.func @transform_0(%arg0: i32) -> (i32, i32) {
    %c0_i32 = arith.constant 0 : i32
    %c0_i32_0 = arith.constant 0 : i32
    return %arg0, %c0_i32 : i32, i32
  }
  func.func @transform_1(%arg0: i32) -> (i32, i32) {
    %c0_i32 = arith.constant 0 : i32
    %c0_i32_0 = arith.constant 0 : i32
    return %arg0, %c0_i32 : i32, i32
  }
  func.func @transform_2(%arg0: i32) -> (i32, i32) {
    %c0_i32 = arith.constant 0 : i32
    %c0_i32_0 = arith.constant 0 : i32
    %c0_i32_1 = arith.constant 0 : i32
    return %c0_i32, %c0_i32_0 : i32, i32
  }
  func.func @transform_3(%arg0: i32) -> (i32, i32) {
    %c0_i32 = arith.constant 0 : i32
    %c0_i32_0 = arith.constant 0 : i32
    %c0_i32_1 = arith.constant 0 : i32
    return %c0_i32, %c0_i32_0 : i32, i32
  }
  func.func @transform_4(%arg0: i32) -> (i32, i32) {
    %c0_i32 = arith.constant 0 : i32
    %c0_i32_0 = arith.constant 0 : i32
    %c0_i32_1 = arith.constant 0 : i32
    return %c0_i32, %c0_i32_0 : i32, i32
  }
  func.func @transform_5(%arg0: i32) -> (i32, i32) {
    %c0_i32 = arith.constant 0 : i32
    %c0_i32_0 = arith.constant 0 : i32
    %c0_i32_1 = arith.constant 0 : i32
    return %c0_i32, %c0_i32_0 : i32, i32
  }
  func.func @transform_6(%arg0: i32) -> (i32, i32) {
    %c0_i32 = arith.constant 0 : i32
    %c0_i32_0 = arith.constant 0 : i32
    return %arg0, %c0_i32 : i32, i32
  }
}

</mosaic_0001>

<llo_original>
// kernel: discrete_policy_forward.1
$region0: #{discrete_policy_forward.1}
  #allocation0 [shape = 'u32[]', space=smem, size = 0x4, offset = 0x4, fixed_abs, tag = 'smem constant byte address 0x4 - core index']
  #allocation1 [shape = 'u32[72,128]{1,0:T(1,128)}', space=vmem, size = 0x9000, scoped, tag = 'internal scratch']
  %s0 = inlined_call_operand.vmem [shape: f32[8,16], index: 0, kind: input, shape index: {}]
  %s1 = inlined_call_operand.vmem [shape: f32[8,128], index: 1, kind: input, shape index: {}]
  %s2 = inlined_call_operand.vmem [shape: bf16[16,128], index: 2, kind: input, shape index: {}]
  %s3 = inlined_call_operand.vmem [shape: f32[1,128], index: 3, kind: input, shape index: {}]
  %s4 = inlined_call_operand.hbm [shape: bf16[128,128], index: 4, kind: input, shape index: {}]
  %s5 = inlined_call_operand.vmem [shape: f32[1,128], index: 5, kind: input, shape index: {}]
  %s6 = inlined_call_operand.vmem [shape: f32[8,128], index: 6, kind: output, shape index: {}]
  %s7 = sld [smem:[#allocation0]]
  $region38: #{discrete_policy_forward.1} parent=0
    _
  %s9 = ssub.s32 1, %s7
  %s10 = scalar_select 0, %s9, %s7
  $region1: #{discrete_policy_forward.1} parent=0
    #allocation2 [shape = 'u8[32768]{0}', space=vmem, size = 0x8000, scoped, tag = 'input window, operand 4, single buffered']
    #allocation3 [shape = 's32[1]{0}', space=sflag, size = 0x4, scoped, tag = 'scoped memory for discrete_policy_forward.1']
    %11 = vsyncpa [#allocation3], 0
    // Predicated region
    $region2: #{discrete_policy_forward.1} parent=1 // pred_check
      _
    $region3: #{discrete_policy_forward.1} parent=1 // pred_check_branch
      %13 = sbr.rel (0) target = $region5
    $region4: #{discrete_policy_forward.1} parent=1 // pred_region
      _
    $region5: #{discrete_policy_forward.1} parent=1 // pred_fallthru
      _
    // Predicated region
    $region6: #{discrete_policy_forward.1} parent=1 // pred_check
      _
    $region7: #{discrete_policy_forward.1} parent=1 // pred_check_branch
      %15 = sbr.rel (0) target = $region9
    $region8: #{discrete_policy_forward.1} parent=1 // pred_region
      _
    $region9: #{discrete_policy_forward.1} parent=1 // pred_fallthru
      _
    // Predicated region
    $region10: #{discrete_policy_forward.1} parent=1 // pred_check
      _
    $region11: #{discrete_policy_forward.1} parent=1 // pred_check_branch
      %17 = sbr.rel (0) target = $region13
    $region12: #{discrete_policy_forward.1} parent=1 // pred_region
      _
    $region13: #{discrete_policy_forward.1} parent=1 // pred_fallthru
      _
    // Predicated region
    $region14: #{discrete_policy_forward.1} parent=1 // pred_check
      _
    $region15: #{discrete_policy_forward.1} parent=1 // pred_check_branch
      %19 = sbr.rel (0) target = $region17
    $region16: #{discrete_policy_forward.1} parent=1 // pred_region
      _
    $region17: #{discrete_policy_forward.1} parent=1 // pred_fallthru
      _
    // Predicated region
    $region18: #{discrete_policy_forward.1} parent=1 // pred_check
      _
    $region19: #{discrete_policy_forward.1} parent=1 // pred_check_branch
      %21 = sbr.rel (0) target = $region21
    $region20: #{discrete_policy_forward.1} parent=1 // pred_region
      %23 = vsyncadd [#allocation3], 0
      %s24 = sshll.u32 %s4, 4
      %s25 = int_to_ptr.hbm [resolvable:$true] %s24
      %s26 = sshll.u32 [#allocation2], 4
      %s27 = int_to_ptr.vmem [resolvable:$true] %s26
      %32 = dma.hbm_to_vmem [thread:$0]  %s25, 1024, %s27, [#allocation3], 64, 64, 4
    $region21: #{discrete_policy_forward.1} parent=1 // pred_fallthru
      _
    // Predicated region
    $region22: #{discrete_policy_forward.1} parent=1 // pred_check
      _
    $region23: #{discrete_policy_forward.1} parent=1 // pred_check_branch
      %34 = sbr.rel (0) target = $region25
    $region24: #{discrete_policy_forward.1} parent=1 // pred_region
      _
    $region25: #{discrete_policy_forward.1} parent=1 // pred_fallthru
      _
    // Predicated region
    $region26: #{discrete_policy_forward.1} parent=1 // pred_check
      _
    $region27: #{discrete_policy_forward.1} parent=1 // pred_check_branch
      %36 = sbr.rel (0) target = $region29
    $region28: #{discrete_policy_forward.1} parent=1 // pred_region
      %38 = dma.done [#allocation3], 1024
    $region29: #{discrete_policy_forward.1} parent=1 // pred_fallthru
      _
    %v40 = vld [vmem:[%s0] sm:$0xff]
    %v41 = vpack.c.bf16 %v40, %v40
    %v42 = vld [vmem:[%s2] sm:$0xf]
    %v43 = vld [vmem:[%s2 + $0x4] sm:$0xf]
    %v44 = vld [vmem:[%s3] sm:$0x1]
    %v46 = vperm.slane %v44, 0
    %v50 = vunpack.c.l.b16 %v42
    %v51 = vunpack.c.l.b16 %v43
    %v52 = vpack.c.b16 %v51, %v50
    %vm54 = vcmask 130048
    %v56 = vsel %vm54, %v41, 0
    %58 = vmatpush.bf16.msra.mxu0 0
    %59 = vmatpush.bf16.msra.mxu0 0
    %60 = vmatpush.bf16.msra.mxu0 0
    %61 = vmatpush.bf16.msra.mxu0 0
    %62 = vmatpush.bf16.msra.mxu0 0
    %63 = vmatpush.bf16.msra.mxu0 0
    %64 = vmatpush.bf16.msra.mxu0 0
    %65 = vmatpush.bf16.msra.mxu0 %v52
    %66 = vmatmul.bf16.gmra.mxu0 %v56
    %v67 = vpop.f32.mrf.mxu0
    %v68 = vadd.f32 %v46, %v67
    %v69 = vpop.f32.mrf.mxu0
    %70 = vdwg.mxu0
    %v71 = vmax.f32 %v68, 0.0
    %v72 = vpack.c.bf16 %v71, %v71
    %v73 = vld [vmem:[#allocation2] sm:$0xf]
    %v74 = vld [vmem:[#allocation2 + $0x4] sm:$0xf]
    %v75 = vld [vmem:[#allocation2 + $0x8] sm:$0xf]
    %v76 = vld [vmem:[#allocation2 + $0xc] sm:$0xf]
    %v77 = vld [vmem:[#allocation2 + $0x10] sm:$0xf]
    %v78 = vld [vmem:[#allocation2 + $0x14] sm:$0xf]
    %v79 = vld [vmem:[#allocation2 + $0x18] sm:$0xf]
    %v80 = vld [vmem:[#allocation2 + $0x1c] sm:$0xf]
    %v81 = vld [vmem:[#allocation2 + $0x20] sm:$0xf]
    %v82 = vld [vmem:[#allocation2 + $0x24] sm:$0xf]
    %v83 = vld [vmem:[#allocation2 + $0x28] sm:$0xf]
    %v84 = vld [vmem:[#allocation2 + $0x2c] sm:$0xf]
    %v85 = vld [vmem:[#allocation2 + $0x30] sm:$0xf]
    %v86 = vld [vmem:[#allocation2 + $0x34] sm:$0xf]
    %v87 = vld [vmem:[#allocation2 + $0x38] sm:$0xf]
    %v88 = vld [vmem:[#allocation2 + $0x3c] sm:$0xf]
    %v89 = vld [vmem:[%s5] sm:$0x1]
    %v91 = vperm.slane %v89, 0
    %v109 = vunpack.c.l.b16 %v73
    %v110 = vunpack.c.l.b16 %v74
    %v111 = vunpack.c.l.b16 %v75
    %v112 = vunpack.c.l.b16 %v76
    %v113 = vunpack.c.l.b16 %v77
    %v114 = vunpack.c.l.b16 %v78
    %v115 = vunpack.c.l.b16 %v79
    %v116 = vunpack.c.l.b16 %v80
    %v117 = vunpack.c.l.b16 %v81
    %v118 = vunpack.c.l.b16 %v82
    %v119 = vunpack.c.l.b16 %v83
    %v120 = vunpack.c.l.b16 %v84
    %v121 = vunpack.c.l.b16 %v85
    %v122 = vunpack.c.l.b16 %v86
    %v123 = vunpack.c.l.b16 %v87
    %v124 = vunpack.c.l.b16 %v88
    %v125 = vpack.c.b16 %v110, %v109
    %v126 = vpack.c.b16 %v112, %v111
    %v127 = vpack.c.b16 %v114, %v113
    %v128 = vpack.c.b16 %v116, %v115
    %v129 = vpack.c.b16 %v118, %v117
    %v130 = vpack.c.b16 %v120, %v119
    %v131 = vpack.c.b16 %v122, %v121
    %v132 = vpack.c.b16 %v124, %v123
    %141 = vmatpush.bf16.msra.mxu0 %v132
    %142 = vmatpush.bf16.msra.mxu0 %v131
    %143 = vmatpush.bf16.msra.mxu0 %v130
    %144 = vmatpush.bf16.msra.mxu0 %v129
    %145 = vmatpush.bf16.msra.mxu0 %v128
    %146 = vmatpush.bf16.msra.mxu0 %v127
    %147 = vmatpush.bf16.msra.mxu0 %v126
    %148 = vmatpush.bf16.msra.mxu0 %v125
    %149 = vmatmul.bf16.gmra.mxu0 %v72
    %v150 = vpop.f32.mrf.mxu0
    %v151 = vadd.f32 %v91, %v150
    %v152 = vpop.f32.mrf.mxu0
    %153 = vdwg.mxu0
    %v154 = vld [vmem:[%s1] sm:$0xff]
    %v155 = vadd.f32 %v151, %v154
    %v156 = vlaneseq
    %v157 = vand.u32 %v156, 127
    %158 = vmax.xlane.f32.xlu0 %v155
    %v159 = vpop.xlane.xlu0 %158
    %vm160 = vcmp.ge.f32.partialorder %v155, %v159
    %v161 = vsel %vm160, %v157, 128
    %v162 = vand.u32 %v161, 65535
    %v163 = vshra.s32 %v161, 16
    %v164 = vcvt.s32.f32 %v162
    %v165 = vcvt.s32.f32 %v163
    %166 = vmin.xlane.f32.xlu0 %v165
    %v167 = vpop.xlane.xlu0 %166
    %vm168 = vcmp.eq.f32.partialorder %v165, %v167
    %v169 = vsel %vm168, %v164, inf
    %170 = vmin.xlane.f32.xlu0 %v169
    %v171 = vpop.xlane.xlu0 %170
    %v172 = vcvt.f32.s32 %v171
    %v173 = vcvt.f32.s32 %v167
    %v174 = vshll.u32 %v173, 16
    %v175 = vadd.s32 %v174, %v172
    %176 = vmax.xlane.f32.xlu0 %v151
    %v177 = vpop.xlane.xlu0 %176
    %v178 = vsub.f32 %v151, %v177
    %v179 = vmul.f32 %v178, 1.442695
    %v180 = vpow.pop %v179
    %181 = vadd.xlane.f32.xlu0 %v180
    %v182 = vpop.xlane.xlu0 %181
    %v183 = vlog2.pop %v182
    %v184 = vmul.f32 %v183, 0.6931472
    %v185 = vsub.f32 %v178, %v184
    %vm186 = vcmp.eq.s32.totalorder %v157, %v175
    %v187 = vsel %vm186, %v185, -inf
    %188 = vmax.xlane.f32.xlu0 %v187
    %v189 = vpop.xlane.xlu0 %188
    %v190 = vcvt.s32.f32 %v175
    %vm191 = vcmp.eq.s32.totalorder %v157, 0
    %vm192 = vcmp.eq.s32.totalorder %v157, 1
    %v193 = vsel %vm192, %v189, 0.0
    %v194 = vsel %vm191, %v190, %v193
    %195 = vst [vmem:[%s6] sm:$0xff] %v194
    // Predicated region
    $region30: #{discrete_policy_forward.1} parent=1 // pred_check
      _
    $region31: #{discrete_policy_forward.1} parent=1 // pred_check_branch
      %197 = sbr.rel (0) target = $region33
    $region32: #{discrete_policy_forward.1} parent=1 // pred_region
      _
    $region33: #{discrete_policy_forward.1} parent=1 // pred_fallthru
      _
    // Predicated region
    $region34: #{discrete_policy_forward.1} parent=1 // pred_check
      _
    $region35: #{discrete_policy_forward.1} parent=1 // pred_check_branch
      %199 = sbr.rel (0) target = $region37
    $region36: #{discrete_policy_forward.1} parent=1 // pred_region
      _
    $region37: #{discrete_policy_forward.1} parent=1 // pred_fallthru
      _
    %200 = vsyncpa [#allocation3], 1

</llo_original>
